<compile_context>
chip_gen: v6e
topology: v6e:2x2x1
jax: 0.10.0
libtpu: 0.0.40
codegen_flags: <defaults>
</compile_context>

<pallas_src>
import functools

import jax
import jax.numpy as jnp
from jax.experimental import pallas as pl
from jax.experimental.pallas import tpu as pltpu


def _ohkm_mse_kernel(pred_ref, gt_ref, w_ref, out_ref, *, topk, hw, chunk, batch):
    tb, num_j, _ = pred_ref.shape

    # Chunked spatial reduction: ssq[b, j] = sum_hw (pred - gt)^2, accumulated
    # in f32 from slab-sized temporaries (keeps peak VMEM ~ the input block).
    ssq = jnp.zeros((tb, num_j), jnp.float32)
    off = 0
    while off < hw:                     # static Python unroll (hw, chunk static)
        c = min(chunk, hw - off)
        p = pred_ref[:, :, off:off + c].astype(jnp.float32)
        g = gt_ref[:, :, off:off + c].astype(jnp.float32)
        d = p - g
        ssq = ssq + jnp.sum(d * d, axis=-1)
        off += c

    # 0.5 * mean(((p - g) * w)^2 over HW)  ==  (0.5 / HW) * w^2 * sum((p-g)^2)
    w = w_ref[0]                                               # (tb, J) f32
    loss = ssq * (w * w) * jnp.float32(0.5 / hw)               # (tb, J)

    # Mask rows past the real batch size (partial trailing block): their VMEM
    # contents are undefined, so force them to exactly 0 (where is NaN-safe).
    if batch % tb != 0:
        row0 = pl.program_id(0) * tb
        rows = row0 + jax.lax.broadcasted_iota(jnp.int32, (tb, 1), 0)
        loss = jnp.where(rows < batch, loss, jnp.float32(0.0))

    # OHKM: per-sample sum of the top-k joint losses; J sits on lanes so each
    # max / argmin step is a single lane reduction covering all tb rows at
    # once. Masking exactly one occurrence per step matches torch.topk ties.
    iota_j = jax.lax.broadcasted_iota(jnp.int32, (tb, num_j), 1)
    work = loss
    acc = jnp.zeros((tb, 1), jnp.float32)
    for _ in range(topk):
        m = jnp.max(work, axis=-1, keepdims=True)              # (tb, 1)
        acc = acc + m
        idx = jnp.min(jnp.where(work == m, iota_j, jnp.int32(num_j)),
                      axis=-1, keepdims=True)                  # (tb, 1)
        work = jnp.where(iota_j == idx, jnp.float32(-jnp.inf), work)

    # Per-block scalar (sum over this block's per-sample top-k sums),
    # replicated into one full (8, 128) vreg so the store is unmasked and
    # lane-dense. The / topk and the batch mean happen in the wrapper.
    blk = jnp.sum(acc, axis=0, keepdims=True)                  # (1, 1)
    out_ref[...] = jnp.broadcast_to(blk[None], (1, 8, 128))


def _vmem_capacity_bytes():
    """Per-TensorCore VMEM to budget against (conservative if unknown)."""
    cap = 64 * 1024 * 1024                 # safe default: v7x per-TC VMEM
    try:
        kind = jax.devices()[0].device_kind.lower()
        if "v5" in kind or "v6" in kind:   # 128 MiB VMEM parts
            cap = 128 * 1024 * 1024
    except Exception:
        pass
    try:                                   # never exceed what the runtime reports
        info = pltpu.get_tpu_info()
        reported = int(getattr(info, "vmem_capacity_bytes", 0) or 0)
        if reported >= 64 * 1024 * 1024:
            cap = min(cap, reported)
    except Exception:
        pass
    return cap


def joints_ohkm_mse_loss(output, target, target_weight, *,
                         use_target_weight=True, topk=8):
    """output/target: (B, J, H, W); target_weight: (B, J) or (B, J, 1)."""
    B, J, H, W = output.shape
    HW = H * W
    assert topk <= J, f"topk={topk} must be <= num_joints={J}"

    # Keep native dtype in HBM (no extra read+write f32 copy pass, no padding).
    pred = output.reshape(B, J, HW)
    gt = target.reshape(B, J, HW)
    if use_target_weight:
        w = target_weight.reshape(B, J).astype(jnp.float32)
    else:
        w = jnp.ones((B, J), jnp.float32)

    itemsize = jnp.dtype(pred.dtype).itemsize
    chunk = min(HW, 1024)                  # lanes per f32 reduction slab

    # --- tb (samples per grid step) from an explicit VMEM footprint model ---
    vmem_cap = _vmem_capacity_bytes()
    budget = int(vmem_cap * 0.55)
    per_row = 4 * J * HW * itemsize        # 2 inputs x 2 pipeline buffers
    per_row += 3 * 4 * J * chunk           # f32 slabs (p, g, d) for one chunk
    per_row += 8 * 4 * J                   # ssq / loss / work / iota / acc temps
    tb = max(1, budget // per_row)
    # Guarantee >= min(B, 4) grid blocks: megacore sharding on v7x + overlap.
    tb = min(tb, max(1, B // min(B, 4)))
    num_blocks = pl.cdiv(B, tb)

    # Pad only the tiny weight table so every block reads tb in-bounds rows;
    # padded rows are zero and additionally masked in-kernel.
    G = num_blocks * tb
    if G != B:
        w = jnp.pad(w, ((0, G - B), (0, 0)))
    w = w.reshape(num_blocks, tb, J)

    footprint = per_row * tb + 2 * G * J * 4 + 2 * 8 * 128 * 4 + (2 << 20)
    vmem_limit = int(min(vmem_cap - (8 << 20),
                         max(32 << 20, int(footprint * 1.2))))

    kernel = functools.partial(_ohkm_mse_kernel, topk=topk, hw=HW,
                               chunk=chunk, batch=B)
    out = pl.pallas_call(
        kernel,
        out_shape=jax.ShapeDtypeStruct((num_blocks, 8, 128), jnp.float32),
        grid_spec=pltpu.PrefetchScalarGridSpec(
            num_scalar_prefetch=0,
            grid=(num_blocks,),
            in_specs=[
                pl.BlockSpec((tb, J, HW), lambda b: (b, 0, 0)),
                pl.BlockSpec((tb, J, HW), lambda b: (b, 0, 0)),
                pl.BlockSpec((1, tb, J), lambda b: (b, 0, 0)),
            ],
            out_specs=pl.BlockSpec((1, 8, 128), lambda b: (b, 0, 0)),
        ),
        compiler_params=pltpu.CompilerParams(
            dimension_semantics=("parallel",),
            vmem_limit_bytes=vmem_limit,
        ),
    )(pred, gt, w)

    # (sum over blocks of per-block top-k sums) / topk / B
    return jnp.sum(out[:, 0, 0]) / (topk * B)


def _reference(output, target, target_weight, *, use_target_weight=True, topk=8):
    B, J = output.shape[:2]
    pred = output.reshape(B, J, -1).astype(jnp.float32)
    gt = target.reshape(B, J, -1).astype(jnp.float32)
    if use_target_weight:
        w = target_weight.reshape(B, J, 1).astype(jnp.float32)
    else:
        w = jnp.ones((B, J, 1), jnp.float32)
    loss = 0.5 * jnp.mean(((pred - gt) * w) ** 2, axis=-1)   # (B, J)
    topv, _ = jax.lax.top_k(loss, topk)
    return jnp.mean(jnp.sum(topv, axis=-1) / topk)


if __name__ == "__main__":
    # Small shapes consistent with pose-estimation heatmaps.
    B, J, H, W = 2, 16, 16, 16
    TOPK = 8

    key = jax.random.PRNGKey(0)
    k1, k2, k3 = jax.random.split(key, 3)
    output = jax.random.normal(k1, (B, J, H, W), dtype=jnp.float32)
    target = jax.random.normal(k2, (B, J, H, W), dtype=jnp.float32)
    # deterministic per-joint visibility weights in [0, 1]
    target_weight = jax.random.uniform(k3, (B, J, 1), dtype=jnp.float32)

    got = joints_ohkm_mse_loss(output, target, target_weight,
                               use_target_weight=True, topk=TOPK)
    got = jax.block_until_ready(got)

    want = _reference(output, target, target_weight,
                      use_target_weight=True, topk=TOPK)
    assert jnp.allclose(got, want, rtol=1e-4, atol=1e-6), (got, want)

    print("KERNEL_OK")
</pallas_src>

<mosaic_0001>
module attributes {stable_mosaic.version = 11 : i64} {
  func.func @_ohkm_mse_kernel(%arg0: i32, %arg1: memref<1x16x256xf32, #tpu.memory_space<vmem>>, %arg2: memref<1x16x256xf32, #tpu.memory_space<vmem>>, %arg3: memref<1x1x16xf32, #tpu.memory_space<vmem>>, %arg4: memref<1x8x128xf32, #tpu.memory_space<vmem>>) attributes {dimension_semantics = [#tpu.dimension_semantics<parallel>], iteration_bounds = array<i64: 2>, scalar_prefetch = 0 : i64, scratch_operands = 0 : i64, tpu.core_type = #tpu.core_type<tc>, window_params = [{transform_indices = @transform_0, window_bounds = array<i64: 1, 16, 256>}, {transform_indices = @transform_1, window_bounds = array<i64: 1, 16, 256>}, {transform_indices = @transform_2, window_bounds = array<i64: 1, 1, 16>}, {transform_indices = @transform_3, window_bounds = array<i64: 1, 8, 128>}]} {
    %cst = arith.constant 0.000000e+00 : f32
    %0 = vector.broadcast %cst : f32 to vector<1x16xf32>
    %c0 = arith.constant 0 : index
    %c0_0 = arith.constant 0 : index
    %c0_1 = arith.constant 0 : index
    %1 = vector.load %arg1[%c0, %c0_0, %c0_1] : memref<1x16x256xf32, #tpu.memory_space<vmem>>, vector<1x16x256xf32>
    %c0_2 = arith.constant 0 : index
    %c0_3 = arith.constant 0 : index
    %c0_4 = arith.constant 0 : index
    %2 = vector.load %arg2[%c0_2, %c0_3, %c0_4] : memref<1x16x256xf32, #tpu.memory_space<vmem>>, vector<1x16x256xf32>
    %3 = arith.subf %1, %2 : vector<1x16x256xf32>
    %4 = arith.mulf %3, %3 : vector<1x16x256xf32>
    %cst_5 = arith.constant dense<0.000000e+00> : vector<1x16xf32>
    %5 = vector.multi_reduction <add>, %4, %cst_5 [2] : vector<1x16x256xf32> to vector<1x16xf32>
    %6 = arith.addf %0, %5 : vector<1x16xf32>
    %c0_6 = arith.constant 0 : index
    %c0_7 = arith.constant 0 : index
    %c0_8 = arith.constant 0 : index
    %7 = vector.load %arg3[%c0_6, %c0_7, %c0_8] : memref<1x1x16xf32, #tpu.memory_space<vmem>>, vector<1x1x16xf32>
    %8 = vector.shape_cast %7 : vector<1x1x16xf32> to vector<1x16xf32>
    %9 = arith.mulf %8, %8 : vector<1x16xf32>
    %10 = arith.mulf %6, %9 : vector<1x16xf32>
    %cst_9 = arith.constant 0.001953125 : f32
    %11 = vector.broadcast %cst_9 : f32 to vector<1x16xf32>
    %12 = arith.mulf %10, %11 : vector<1x16xf32>
    %13 = tpu.iota {dimensions = array<i32: 1>} : vector<1x16xi32>
    %cst_10 = arith.constant 0.000000e+00 : f32
    %14 = vector.broadcast %cst_10 : f32 to vector<1x1xf32>
    %cst_11 = arith.constant dense<0xFF800000> : vector<1xf32>
    %15 = vector.multi_reduction <maximumf>, %12, %cst_11 [1] : vector<1x16xf32> to vector<1xf32>
    %16 = vector.shape_cast %15 : vector<1xf32> to vector<1x1xf32>
    %17 = arith.addf %14, %16 : vector<1x1xf32>
    %18 = vector.broadcast %16 : vector<1x1xf32> to vector<1x16xf32>
    %19 = arith.cmpf oeq, %12, %18 : vector<1x16xf32>
    %c16_i32 = arith.constant 16 : i32
    %20 = vector.broadcast %c16_i32 : i32 to vector<1x16xi32>
    %21 = arith.select %19, %13, %20 : vector<1x16xi1>, vector<1x16xi32>
    %cst_12 = arith.constant dense<2147483647> : vector<1xi32>
    %22 = vector.multi_reduction <minsi>, %21, %cst_12 [1] : vector<1x16xi32> to vector<1xi32>
    %23 = vector.shape_cast %22 : vector<1xi32> to vector<1x1xi32>
    %24 = vector.broadcast %23 : vector<1x1xi32> to vector<1x16xi32>
    %25 = arith.cmpi eq, %13, %24 : vector<1x16xi32>
    %cst_13 = arith.constant 0xFF800000 : f32
    %26 = vector.broadcast %cst_13 : f32 to vector<1x16xf32>
    %27 = arith.select %25, %26, %12 : vector<1x16xi1>, vector<1x16xf32>
    %cst_14 = arith.constant dense<0xFF800000> : vector<1xf32>
    %28 = vector.multi_reduction <maximumf>, %27, %cst_14 [1] : vector<1x16xf32> to vector<1xf32>
    %29 = vector.shape_cast %28 : vector<1xf32> to vector<1x1xf32>
    %30 = arith.addf %17, %29 : vector<1x1xf32>
    %31 = vector.broadcast %29 : vector<1x1xf32> to vector<1x16xf32>
    %32 = arith.cmpf oeq, %27, %31 : vector<1x16xf32>
    %c16_i32_15 = arith.constant 16 : i32
    %33 = vector.broadcast %c16_i32_15 : i32 to vector<1x16xi32>
    %34 = arith.select %32, %13, %33 : vector<1x16xi1>, vector<1x16xi32>
    %cst_16 = arith.constant dense<2147483647> : vector<1xi32>
    %35 = vector.multi_reduction <minsi>, %34, %cst_16 [1] : vector<1x16xi32> to vector<1xi32>
    %36 = vector.shape_cast %35 : vector<1xi32> to vector<1x1xi32>
    %37 = vector.broadcast %36 : vector<1x1xi32> to vector<1x16xi32>
    %38 = arith.cmpi eq, %13, %37 : vector<1x16xi32>
    %cst_17 = arith.constant 0xFF800000 : f32
    %39 = vector.broadcast %cst_17 : f32 to vector<1x16xf32>
    %40 = arith.select %38, %39, %27 : vector<1x16xi1>, vector<1x16xf32>
    %cst_18 = arith.constant dense<0xFF800000> : vector<1xf32>
    %41 = vector.multi_reduction <maximumf>, %40, %cst_18 [1] : vector<1x16xf32> to vector<1xf32>
    %42 = vector.shape_cast %41 : vector<1xf32> to vector<1x1xf32>
    %43 = arith.addf %30, %42 : vector<1x1xf32>
    %44 = vector.broadcast %42 : vector<1x1xf32> to vector<1x16xf32>
    %45 = arith.cmpf oeq, %40, %44 : vector<1x16xf32>
    %c16_i32_19 = arith.constant 16 : i32
    %46 = vector.broadcast %c16_i32_19 : i32 to vector<1x16xi32>
    %47 = arith.select %45, %13, %46 : vector<1x16xi1>, vector<1x16xi32>
    %cst_20 = arith.constant dense<2147483647> : vector<1xi32>
    %48 = vector.multi_reduction <minsi>, %47, %cst_20 [1] : vector<1x16xi32> to vector<1xi32>
    %49 = vector.shape_cast %48 : vector<1xi32> to vector<1x1xi32>
    %50 = vector.broadcast %49 : vector<1x1xi32> to vector<1x16xi32>
    %51 = arith.cmpi eq, %13, %50 : vector<1x16xi32>
    %cst_21 = arith.constant 0xFF800000 : f32
    %52 = vector.broadcast %cst_21 : f32 to vector<1x16xf32>
    %53 = arith.select %51, %52, %40 : vector<1x16xi1>, vector<1x16xf32>
    %cst_22 = arith.constant dense<0xFF800000> : vector<1xf32>
    %54 = vector.multi_reduction <maximumf>, %53, %cst_22 [1] : vector<1x16xf32> to vector<1xf32>
    %55 = vector.shape_cast %54 : vector<1xf32> to vector<1x1xf32>
    %56 = arith.addf %43, %55 : vector<1x1xf32>
    %57 = vector.broadcast %55 : vector<1x1xf32> to vector<1x16xf32>
    %58 = arith.cmpf oeq, %53, %57 : vector<1x16xf32>
    %c16_i32_23 = arith.constant 16 : i32
    %59 = vector.broadcast %c16_i32_23 : i32 to vector<1x16xi32>
    %60 = arith.select %58, %13, %59 : vector<1x16xi1>, vector<1x16xi32>
    %cst_24 = arith.constant dense<2147483647> : vector<1xi32>
    %61 = vector.multi_reduction <minsi>, %60, %cst_24 [1] : vector<1x16xi32> to vector<1xi32>
    %62 = vector.shape_cast %61 : vector<1xi32> to vector<1x1xi32>
    %63 = vector.broadcast %62 : vector<1x1xi32> to vector<1x16xi32>
    %64 = arith.cmpi eq, %13, %63 : vector<1x16xi32>
    %cst_25 = arith.constant 0xFF800000 : f32
    %65 = vector.broadcast %cst_25 : f32 to vector<1x16xf32>
    %66 = arith.select %64, %65, %53 : vector<1x16xi1>, vector<1x16xf32>
    %cst_26 = arith.constant dense<0xFF800000> : vector<1xf32>
    %67 = vector.multi_reduction <maximumf>, %66, %cst_26 [1] : vector<1x16xf32> to vector<1xf32>
    %68 = vector.shape_cast %67 : vector<1xf32> to vector<1x1xf32>
    %69 = arith.addf %56, %68 : vector<1x1xf32>
    %70 = vector.broadcast %68 : vector<1x1xf32> to vector<1x16xf32>
    %71 = arith.cmpf oeq, %66, %70 : vector<1x16xf32>
    %c16_i32_27 = arith.constant 16 : i32
    %72 = vector.broadcast %c16_i32_27 : i32 to vector<1x16xi32>
    %73 = arith.select %71, %13, %72 : vector<1x16xi1>, vector<1x16xi32>
    %cst_28 = arith.constant dense<2147483647> : vector<1xi32>
    %74 = vector.multi_reduction <minsi>, %73, %cst_28 [1] : vector<1x16xi32> to vector<1xi32>
    %75 = vector.shape_cast %74 : vector<1xi32> to vector<1x1xi32>
    %76 = vector.broadcast %75 : vector<1x1xi32> to vector<1x16xi32>
    %77 = arith.cmpi eq, %13, %76 : vector<1x16xi32>
    %cst_29 = arith.constant 0xFF800000 : f32
    %78 = vector.broadcast %cst_29 : f32 to vector<1x16xf32>
    %79 = arith.select %77, %78, %66 : vector<1x16xi1>, vector<1x16xf32>
    %cst_30 = arith.constant dense<0xFF800000> : vector<1xf32>
    %80 = vector.multi_reduction <maximumf>, %79, %cst_30 [1] : vector<1x16xf32> to vector<1xf32>
    %81 = vector.shape_cast %80 : vector<1xf32> to vector<1x1xf32>
    %82 = arith.addf %69, %81 : vector<1x1xf32>
    %83 = vector.broadcast %81 : vector<1x1xf32> to vector<1x16xf32>
    %84 = arith.cmpf oeq, %79, %83 : vector<1x16xf32>
    %c16_i32_31 = arith.constant 16 : i32
    %85 = vector.broadcast %c16_i32_31 : i32 to vector<1x16xi32>
    %86 = arith.select %84, %13, %85 : vector<1x16xi1>, vector<1x16xi32>
    %cst_32 = arith.constant dense<2147483647> : vector<1xi32>
    %87 = vector.multi_reduction <minsi>, %86, %cst_32 [1] : vector<1x16xi32> to vector<1xi32>
    %88 = vector.shape_cast %87 : vector<1xi32> to vector<1x1xi32>
    %89 = vector.broadcast %88 : vector<1x1xi32> to vector<1x16xi32>
    %90 = arith.cmpi eq, %13, %89 : vector<1x16xi32>
    %cst_33 = arith.constant 0xFF800000 : f32
    %91 = vector.broadcast %cst_33 : f32 to vector<1x16xf32>
    %92 = arith.select %90, %91, %79 : vector<1x16xi1>, vector<1x16xf32>
    %cst_34 = arith.constant dense<0xFF800000> : vector<1xf32>
    %93 = vector.multi_reduction <maximumf>, %92, %cst_34 [1] : vector<1x16xf32> to vector<1xf32>
    %94 = vector.shape_cast %93 : vector<1xf32> to vector<1x1xf32>
    %95 = arith.addf %82, %94 : vector<1x1xf32>
    %96 = vector.broadcast %94 : vector<1x1xf32> to vector<1x16xf32>
    %97 = arith.cmpf oeq, %92, %96 : vector<1x16xf32>
    %c16_i32_35 = arith.constant 16 : i32
    %98 = vector.broadcast %c16_i32_35 : i32 to vector<1x16xi32>
    %99 = arith.select %97, %13, %98 : vector<1x16xi1>, vector<1x16xi32>
    %cst_36 = arith.constant dense<2147483647> : vector<1xi32>
    %100 = vector.multi_reduction <minsi>, %99, %cst_36 [1] : vector<1x16xi32> to vector<1xi32>
    %101 = vector.shape_cast %100 : vector<1xi32> to vector<1x1xi32>
    %102 = vector.broadcast %101 : vector<1x1xi32> to vector<1x16xi32>
    %103 = arith.cmpi eq, %13, %102 : vector<1x16xi32>
    %cst_37 = arith.constant 0xFF800000 : f32
    %104 = vector.broadcast %cst_37 : f32 to vector<1x16xf32>
    %105 = arith.select %103, %104, %92 : vector<1x16xi1>, vector<1x16xf32>
    %cst_38 = arith.constant dense<0xFF800000> : vector<1xf32>
    %106 = vector.multi_reduction <maximumf>, %105, %cst_38 [1] : vector<1x16xf32> to vector<1xf32>
    %107 = vector.shape_cast %106 : vector<1xf32> to vector<1x1xf32>
    %108 = arith.addf %95, %107 : vector<1x1xf32>
    %cst_39 = arith.constant dense<0.000000e+00> : vector<1xf32>
    %109 = vector.multi_reduction <add>, %108, %cst_39 [0] : vector<1x1xf32> to vector<1xf32>
    %110 = vector.shape_cast %109 : vector<1xf32> to vector<1x1xf32>
    %111 = vector.shape_cast %110 : vector<1x1xf32> to vector<1x1x1xf32>
    %112 = vector.shape_cast %111 : vector<1x1x1xf32> to vector<1x1x1xf32>
    %113 = vector.broadcast %112 : vector<1x1x1xf32> to vector<1x8x128xf32>
    %c0_40 = arith.constant 0 : index
    %c0_41 = arith.constant 0 : index
    %c0_42 = arith.constant 0 : index
    %114 = vector.load %arg4[%c0_40, %c0_41, %c0_42] : memref<1x8x128xf32, #tpu.memory_space<vmem>>, vector<1x8x128xf32>
    tpu.vector_store %arg4[%c0_40, %c0_41, %c0_42], %113 {strides = array<i32>} : memref<1x8x128xf32, #tpu.memory_space<vmem>>, vector<1x8x128xf32>,
    return
  }
  func.func @transform_0(%arg0: i32) -> (i32, i32, i32) {
    %c0_i32 = arith.constant 0 : i32
    %c0_i32_0 = arith.constant 0 : i32
    %c0_i32_1 = arith.constant 0 : i32
    return %arg0, %c0_i32, %c0_i32_0 : i32, i32, i32
  }
  func.func @transform_1(%arg0: i32) -> (i32, i32, i32) {
    %c0_i32 = arith.constant 0 : i32
    %c0_i32_0 = arith.constant 0 : i32
    %c0_i32_1 = arith.constant 0 : i32
    return %arg0, %c0_i32, %c0_i32_0 : i32, i32, i32
  }
  func.func @transform_2(%arg0: i32) -> (i32, i32, i32) {
    %c0_i32 = arith.constant 0 : i32
    %c0_i32_0 = arith.constant 0 : i32
    %c0_i32_1 = arith.constant 0 : i32
    return %arg0, %c0_i32, %c0_i32_0 : i32, i32, i32
  }
  func.func @transform_3(%arg0: i32) -> (i32, i32, i32) {
    %c0_i32 = arith.constant 0 : i32
    %c0_i32_0 = arith.constant 0 : i32
    %c0_i32_1 = arith.constant 0 : i32
    return %arg0, %c0_i32, %c0_i32_0 : i32, i32, i32
  }
}

</mosaic_0001>

<llo_original>
// kernel: tpu_custom_call.1
$region0: #{tpu_custom_call.1}
  #allocation0 [shape = 'u32[]', space=smem, size = 0x4, offset = 0x4, fixed_abs, tag = 'smem constant byte address 0x4 - core index']
  #allocation1 [shape = 'u32[144,128]{1,0:T(1,128)}', space=vmem, size = 0x12000, scoped, tag = 'internal scratch']
  %s0 = inlined_call_operand.hbm [shape: f32[2,16,256], index: 0, kind: input, shape index: {}]
  %s1 = inlined_call_operand.hbm [shape: f32[2,16,256], index: 1, kind: input, shape index: {}]
  %s2 = inlined_call_operand.vmem [shape: f32[2,1,16], index: 2, kind: input, shape index: {}]
  %s3 = inlined_call_operand.hbm [shape: f32[2,8,128], index: 3, kind: output, shape index: {}]
  %s4 = sld [smem:[#allocation0]]
  $region53: #{tpu_custom_call.1} parent=0
    _
  %s6 = ssub.s32 1, %s4
  %s7 = scalar_select 0, %s6, %s4
  $region1: #{tpu_custom_call.1} parent=0
    #allocation2 [shape = 'u8[32768]{0}', space=vmem, size = 0x8000, scoped, tag = 'input window, operand 0']
    #allocation3 [shape = 's32[2]{0}', space=sflag, size = 0x8, scoped, tag = 'scoped memory for tpu_custom_call.1']
    #allocation4 [shape = 's32[2]{0}', space=sflag, size = 0x8, scoped, tag = 'scoped memory for tpu_custom_call.1']
    #allocation5 [shape = 'u8[32768]{0}', space=vmem, size = 0x8000, scoped, tag = 'input window, operand 1']
    #allocation6 [shape = 's32[2]{0}', space=sflag, size = 0x8, scoped, tag = 'scoped memory for tpu_custom_call.1']
    #allocation7 [shape = 'u8[8192]{0}', space=vmem, size = 0x2000, scoped, tag = 'output window, operand 0']
    %8 = vsyncpa [#allocation3], 0
    %s9 = scalar_lea.sflag [#allocation3], 1
    %10 = vsyncpa %s9, 0
    %11 = vsyncpa [#allocation6], 0
    %s12 = scalar_lea.sflag [#allocation6], 1
    %13 = vsyncpa %s12, 0
    %14 = vsyncpa [#allocation4], 0
    %s15 = scalar_lea.sflag [#allocation4], 1
    %16 = vsyncpa %s15, 0
    loop: start=0, step=1, limit=4
    $region2: #{tpu_custom_call.1} parent=1 // loop_pre_header
      _
    $region3: #{tpu_custom_call.1} parent=1 // loop_header
      %s18 = sphi 0, %s22
      %p19 = scmp.ge.s32.totalorder %s18, 4
      %s28 = sphi 0, %s30
      %s31 = sphi 0, %s28
      %s32 = sphi 0, %s31
      %s48 = sphi 0, %s32
      %s54 = sphi 0, %s56
      %s57 = sphi 0, %s54
      %s58 = sphi 0, %s57
      %s74 = sphi 0, %s58
      %s80 = sphi 0, %s82
      %s83 = sphi 0, %s80
      %s84 = sphi 0, %s83
      %s100 = sphi 0, %s84
      %s106 = sphi 0, %s108
      %s109 = sphi 0, %s106
      %s110 = sphi 0, %s109
      %s126 = sphi 0, %s110
    $region4: #{tpu_custom_call.1} parent=1 // loop_header_branch
      %21 = sbr.rel (%p19) target = $region8
    $region5: #{tpu_custom_call.1} parent=1 // loop_body
      %s23 = ssub.s32 %s18, 1
      %s24 = ssub.s32 %s18, 2
      %s25 = sadd.s32 %s18, 1
      %s26 = ssub.s32 %s18, %s25
      %p27 = scmp.eq.s32.totalorder %s26, 0
      %s29 = sadd.s32 %s28, 1
      %s30 = scalar_select %p27, %s28, %s29
      %p33 = pneg %p27
      %p34 = scmp.eq.s32.totalorder %s18, 1
      %p35 = por %p33, %p34
      %p36 = scmp.ne.s32.totalorder %s28, %s31
      %p37 = scmp.eq.s32.totalorder %s18, 0
      %p38 = por %p36, %p37
      %p39 = scmp.ne.s32.totalorder %s28, %s31
      %p40 = scmp.eq.s32.totalorder %s23, 1
      %p41 = por %p39, %p40
      %p42 = scmp.ne.s32.totalorder %s31, %s32
      %p43 = scmp.eq.s32.totalorder %s23, 0
      %p44 = por %p42, %p43
      %p45 = scmp.ne.s32.totalorder %s31, %s32
      %p46 = scmp.eq.s32.totalorder %s24, 1
      %p47 = por %p45, %p46
      %p49 = scmp.ne.s32.totalorder %s32, %s48
      %p50 = scmp.eq.s32.totalorder %s24, 0
      %p51 = por %p49, %p50
      %s52 = ssub.s32 %s18, %s25
      %p53 = scmp.eq.s32.totalorder %s52, 0
      %s55 = sadd.s32 %s54, 1
      %s56 = scalar_select %p53, %s54, %s55
      %p59 = pneg %p53
      %p60 = scmp.eq.s32.totalorder %s18, 1
      %p61 = por %p59, %p60
      %p62 = scmp.ne.s32.totalorder %s54, %s57
      %p63 = scmp.eq.s32.totalorder %s18, 0
      %p64 = por %p62, %p63
      %p65 = scmp.ne.s32.totalorder %s54, %s57
      %p66 = scmp.eq.s32.totalorder %s23, 1
      %p67 = por %p65, %p66
      %p68 = scmp.ne.s32.totalorder %s57, %s58
      %p69 = scmp.eq.s32.totalorder %s23, 0
      %p70 = por %p68, %p69
      %p71 = scmp.ne.s32.totalorder %s57, %s58
      %p72 = scmp.eq.s32.totalorder %s24, 1
      %p73 = por %p71, %p72
      %p75 = scmp.ne.s32.totalorder %s58, %s74
      %p76 = scmp.eq.s32.totalorder %s24, 0
      %p77 = por %p75, %p76
      %s78 = ssub.s32 %s18, %s25
      %p79 = scmp.eq.s32.totalorder %s78, 0
      %s81 = sadd.s32 %s80, 1
      %s82 = scalar_select %p79, %s80, %s81
      %p85 = pneg %p79
      %p86 = scmp.eq.s32.totalorder %s18, 1
      %p87 = por %p85, %p86
      %p88 = scmp.ne.s32.totalorder %s80, %s83
      %p89 = scmp.eq.s32.totalorder %s18, 0
      %p90 = por %p88, %p89
      %p91 = scmp.ne.s32.totalorder %s80, %s83
      %p92 = scmp.eq.s32.totalorder %s23, 1
      %p93 = por %p91, %p92
      %p94 = scmp.ne.s32.totalorder %s83, %s84
      %p95 = scmp.eq.s32.totalorder %s23, 0
      %p96 = por %p94, %p95
      %p97 = scmp.ne.s32.totalorder %s83, %s84
      %p98 = scmp.eq.s32.totalorder %s24, 1
      %p99 = por %p97, %p98
      %p101 = scmp.ne.s32.totalorder %s84, %s100
      %p102 = scmp.eq.s32.totalorder %s24, 0
      %p103 = por %p101, %p102
      %s104 = ssub.s32 %s18, %s25
      %p105 = scmp.eq.s32.totalorder %s104, 0
      %s107 = sadd.s32 %s106, 1
      %s108 = scalar_select %p105, %s106, %s107
      %p111 = pneg %p105
      %p112 = scmp.eq.s32.totalorder %s18, 1
      %p113 = por %p111, %p112
      %p114 = scmp.ne.s32.totalorder %s106, %s109
      %p115 = scmp.eq.s32.totalorder %s18, 0
      %p116 = por %p114, %p115
      %p117 = scmp.ne.s32.totalorder %s106, %s109
      %p118 = scmp.eq.s32.totalorder %s23, 1
      %p119 = por %p117, %p118
      %p120 = scmp.ne.s32.totalorder %s109, %s110
      %p121 = scmp.eq.s32.totalorder %s23, 0
      %p122 = por %p120, %p121
      %p123 = scmp.ne.s32.totalorder %s109, %s110
      %p124 = scmp.eq.s32.totalorder %s24, 1
      %p125 = por %p123, %p124
      %p127 = scmp.ne.s32.totalorder %s110, %s126
      %p128 = scmp.eq.s32.totalorder %s24, 0
      %p129 = por %p127, %p128
      %p130 = scmp.le.s32.totalorder 1, %s18
      %p131 = scmp.lt.s32.totalorder %s18, 3
      %p132 = pnand %p130, %p131
      %p133 = pneg %p132
      // Predicated region
      $region9: #{tpu_custom_call.1} parent=5 // pred_check
        _
      $region10: #{tpu_custom_call.1} parent=5 // pred_check_branch
        %135 = sbr.rel (%p132) target = $region12
      $region11: #{tpu_custom_call.1} parent=5 // pred_region
        %s136 = ssub.s32 %s18, 1
      $region12: #{tpu_custom_call.1} parent=5 // pred_fallthru
        _
      %p137 = scmp.lt.s32.totalorder %s18, 2
      // Predicated region
      $region13: #{tpu_custom_call.1} parent=5 // pred_check
        %p138 = pneg %p137
      $region14: #{tpu_custom_call.1} parent=5 // pred_check_branch
        %140 = sbr.rel (%p138) target = $region16
      $region15: #{tpu_custom_call.1} parent=5 // pred_region
        // Predicated region
        $region17: #{tpu_custom_call.1} parent=15 // pred_check
          %p141 = pneg %p38
        $region18: #{tpu_custom_call.1} parent=15 // pred_check_branch
          %143 = sbr.rel (%p141) target = $region20
        $region19: #{tpu_custom_call.1} parent=15 // pred_region
          %s144 = sand.u32 %s28, 1
          %s145 = scalar_lea.sflag [#allocation3], %s144
          %s146 = sand.u32 %s28, 1
          %s147 = smul.addr %s146, 32
          %s148 = scalar_lea.vmem [#allocation2], %s147
          %s150 = ssub.s32 512, 512
          %151 = vsyncadd %s145, %s150
          %s152 = smul.addr %s18, 4
          %s153 = smul.addr %s152, 128
          %s154 = scalar_lea.hbm %s0, %s153
          %s155 = sshll.u32 %s148, 4
          %s156 = int_to_ptr.vmem [resolvable:$true] %s155
          %161 = dma.hbm_to_vmem [thread:$0]  %s154, 512, %s156, %s145, 256, 256, 16
        $region20: #{tpu_custom_call.1} parent=15 // pred_fallthru
          _
        // Predicated region
        $region21: #{tpu_custom_call.1} parent=15 // pred_check
          %p162 = pneg %p64
        $region22: #{tpu_custom_call.1} parent=15 // pred_check_branch
          %164 = sbr.rel (%p162) target = $region24
        $region23: #{tpu_custom_call.1} parent=15 // pred_region
          %s165 = sand.u32 %s54, 1
          %s166 = scalar_lea.sflag [#allocation6], %s165
          %s167 = sand.u32 %s54, 1
          %s168 = smul.addr %s167, 32
          %s169 = scalar_lea.vmem [#allocation5], %s168
          %s171 = ssub.s32 512, 512
          %172 = vsyncadd %s166, %s171
          %s173 = smul.addr %s18, 4
          %s174 = smul.addr %s173, 128
          %s175 = scalar_lea.hbm %s1, %s174
          %s176 = sshll.u32 %s169, 4
          %s177 = int_to_ptr.vmem [resolvable:$true] %s176
          %182 = dma.hbm_to_vmem [thread:$0]  %s175, 512, %s177, %s166, 256, 256, 16
        $region24: #{tpu_custom_call.1} parent=15 // pred_fallthru
          _
        // Predicated region
        $region25: #{tpu_custom_call.1} parent=15 // pred_check
          %p183 = pneg %p90
        $region26: #{tpu_custom_call.1} parent=15 // pred_check_branch
          %185 = sbr.rel (%p183) target = $region28
        $region27: #{tpu_custom_call.1} parent=15 // pred_region
          %p186 = scmp.lt.s32.totalorder %s18, 1
          %s187 = scalar_select %p186, %s18, 1
          %s188 = scalar_lea.vmem %s2, %s187
        $region28: #{tpu_custom_call.1} parent=15 // pred_fallthru
          _
      $region16: #{tpu_custom_call.1} parent=5 // pred_fallthru
        _
      %p189 = scmp.le.s32.totalorder 1, %s18
      %p190 = scmp.lt.s32.totalorder %s18, 3
      %p191 = pnand %p189, %p190
      %p192 = pneg %p191
      // Predicated region
      $region29: #{tpu_custom_call.1} parent=5 // pred_check
        _
      $region30: #{tpu_custom_call.1} parent=5 // pred_check_branch
        %194 = sbr.rel (%p191) target = $region32
      $region31: #{tpu_custom_call.1} parent=5 // pred_region
        %s195 = ssub.s32 %s18, 1
        %s196 = sand.u32 %s31, 1
        %s197 = scalar_lea.sflag [#allocation3], %s196
        %s198 = sand.u32 %s31, 1
        %s199 = smul.addr %s198, 32
        %s200 = scalar_lea.vmem [#allocation2], %s199
        // Predicated region
        $region33: #{tpu_custom_call.1} parent=31 // pred_check
          %p201 = pneg %p44
        $region34: #{tpu_custom_call.1} parent=31 // pred_check_branch
          %203 = sbr.rel (%p201) target = $region36
        $region35: #{tpu_custom_call.1} parent=31 // pred_region
          %204 = dma.done %s197, 512
        $region36: #{tpu_custom_call.1} parent=31 // pred_fallthru
          _
        %s205 = sand.u32 %s57, 1
        %s206 = scalar_lea.sflag [#allocation6], %s205
        %s207 = sand.u32 %s57, 1
        %s208 = smul.addr %s207, 32
        %s209 = scalar_lea.vmem [#allocation5], %s208
        // Predicated region
        $region37: #{tpu_custom_call.1} parent=31 // pred_check
          %p210 = pneg %p70
        $region38: #{tpu_custom_call.1} parent=31 // pred_check_branch
          %212 = sbr.rel (%p210) target = $region40
        $region39: #{tpu_custom_call.1} parent=31 // pred_region
          %213 = dma.done %s206, 512
        $region40: #{tpu_custom_call.1} parent=31 // pred_fallthru
          _
        %s214 = sand.u32 %s31, 1
        %s215 = scalar_lea.sflag [#allocation3], %s214
        %s216 = sand.u32 %s31, 1
        %s217 = smul.addr %s216, 32
        %s218 = scalar_lea.vmem [#allocation2], %s217
        %p219 = pneg %p44
        %p220 = pneg %p41
        %s221 = sand.u32 %s57, 1
        %s222 = scalar_lea.sflag [#allocation6], %s221
        %s223 = sand.u32 %s57, 1
        %s224 = smul.addr %s223, 32
        %s225 = scalar_lea.vmem [#allocation5], %s224
        %p226 = pneg %p70
        %p227 = pneg %p67
        %p228 = scmp.lt.s32.totalorder %s23, 1
        %s229 = scalar_select %p228, %s23, 1
        %s230 = scalar_lea.vmem %s2, %s229
        %p231 = pneg %p96
        %p232 = pneg %p93
        %p233 = pneg %p122
        %p234 = pneg %p119
        %s235 = sand.u32 %s109, 1
        %s236 = scalar_lea.sflag [#allocation4], %s235
        %s237 = sand.u32 %s109, 1
        %s238 = smul.addr %s237, 8
        %s239 = scalar_lea.vmem [#allocation7], %s238
        %p240 = scmp.lt.s32.totalorder %s23, 1
        %s241 = scalar_select %p240, %s23, 1
        %s242 = scalar_lea.vmem %s2, %s241
        %v243 = vld [vmem:[%s200] sm:$0xff]
        %v244 = vld [vmem:[%s200 + $0x8] sm:$0xff]
        %v245 = vld [vmem:[%s200 + $0x10] sm:$0xff]
        %v246 = vld [vmem:[%s200 + $0x18] sm:$0xff]
        %v247 = vld [vmem:[%s209] sm:$0xff]
        %v248 = vld [vmem:[%s209 + $0x8] sm:$0xff]
        %v249 = vld [vmem:[%s209 + $0x10] sm:$0xff]
        %v250 = vld [vmem:[%s209 + $0x18] sm:$0xff]
        %v251 = vsub.f32 %v243, %v247
        %v252 = vsub.f32 %v244, %v248
        %v253 = vsub.f32 %v245, %v249
        %v254 = vsub.f32 %v246, %v250
        %v255 = vmul.f32 %v251, %v251
        %v256 = vmul.f32 %v252, %v252
        %v257 = vmul.f32 %v253, %v253
        %v258 = vmul.f32 %v254, %v254
        %v259 = vadd.f32 %v255, %v256
        %260 = vadd.xlane.f32.xlu0 %v259
        %v261 = vpop.xlane.xlu0 %260
        %v262 = vadd.f32 %v257, %v258
        %263 = vadd.xlane.f32.xlu0 %v262
        %v264 = vpop.xlane.xlu0 %263
        %v265 = vadd.f32 %v261, 0.0
        %v266 = vadd.f32 %v264, 0.0
        %v267 = vld [vmem:[%s242] sm:$0x1]
        %v268 = vmul.f32 %v267, %v267
        %v270 = vlaneseq
        %v271 = vshrl.u32 %v270, 7
        %v272 = vsub.s32 0, %v271
        %v273 = vrot.slane %v268, %v272
        %275 = vbcast.lane.b32.xlu0 %v273, 256
        %v276 = vpop.permute.xlu0 %275
        %s278 = sor.u32 256, 8
        %279 = vbcast.lane.b32.xlu0 %v273, %s278
        %v280 = vpop.permute.xlu0 %279
        %v283 = vmul.f32 %v265, %v276
        %v284 = vmul.f32 %v266, %v280
        %v285 = vmul.f32 %v283, 0.001953125
        %v286 = vmul.f32 %v284, 0.001953125
        %v287 = vlaneseq
        %v288 = vand.u32 %v287, 127
        %vm289 = vcmask 7168
        %v290 = vsel %vm289, %v285, -inf
        %v291 = vsel %vm289, %v286, -inf
        %v292 = vmax.f32 %v290, %v291
        %v293 = vrot.slane %v292, 4
        %v294 = vmax.f32 %v292, %v293
        %v295 = vrot.slane %v294, 2
        %v296 = vmax.f32 %v294, %v295
        %v297 = vrot.slane %v296, 1
        %v298 = vmax.f32 %v296, %v297
        %v299 = vadd.f32 %v298, 0.0
        %301 = vset.pattern.permute.xlu0 0
        %302 = vperm.xlu0 %301, %v298
        %v303 = vpop.permute.xlu0 %302
        %vm305 = vcmp.eq.f32.partialorder %v285, %v303
        %vm306 = vcmp.eq.f32.partialorder %v286, %v303
        %308 = vbcast.lane.b32.xlu0 %v288, 256
        %v309 = vpop.permute.xlu0 %308
        %s311 = sor.u32 256, 8
        %312 = vbcast.lane.b32.xlu0 %v288, %s311
        %v313 = vpop.permute.xlu0 %312
        %v314 = vsel %vm305, %v309, 16
        %v315 = vsel %vm306, %v313, 16
        %v316 = vsel %vm289, %v314, 2147483647
        %v317 = vsel %vm289, %v315, 2147483647
        %vm318 = vcmp.lt.s32.totalorder %v316, %v317
        %v319 = vsel %vm318, %v316, %v317
        %v320 = vrot.slane %v319, 4
        %vm321 = vcmp.lt.s32.totalorder %v319, %v320
        %v322 = vsel %vm321, %v319, %v320
        %v323 = vrot.slane %v322, 2
        %vm324 = vcmp.lt.s32.totalorder %v322, %v323
        %v325 = vsel %vm324, %v322, %v323
        %v326 = vrot.slane %v325, 1
        %vm327 = vcmp.lt.s32.totalorder %v325, %v326
        %v328 = vsel %vm327, %v325, %v326
        %329 = vset.pattern.permute.xlu0 0
        %330 = vperm.xlu0 %329, %v328
        %v331 = vpop.permute.xlu0 %330
        %vm332 = vcmp.eq.s32.totalorder %v288, %v331
        %335 = vset.pattern.permute.xlu0 0
        %336 = vperm.xlu0 %335, %v285
        %v337 = vpop.permute.xlu0 %336
        %338 = vset.pattern.permute.xlu0 0
        %339 = vperm.xlu0 %338, %v286
        %v340 = vpop.permute.xlu0 %339
        %v341 = vlaneseq
        %v342 = vshrl.u32 %v341, 7
        %v343 = vsub.s32 %v288, %v342
        %v344 = vrot.slane %v337, %v343
        %v345 = vadd.s32 %v288, 4294967288
        %v346 = vlaneseq
        %v347 = vshrl.u32 %v346, 7
        %v348 = vsub.s32 %v345, %v347
        %v349 = vrot.slane %v340, %v348
        %vm350 = vcmask 130112
        %v351 = vsel %vm350, %v349, %v344
        %v353 = vsel %vm332, -inf, %v351
        %vm354 = vcmask 122880
        %v355 = vsel %vm354, %v353, -inf
        %356 = vmax.xlane.f32.xlu0 %v355
        %v357 = vpop.xlane.xlu0 %356
        %v358 = vadd.f32 %v299, %v357
        %vm359 = vcmp.eq.f32.partialorder %v353, %v357
        %v360 = vsel %vm359, %v288, 16
        %v361 = vsel %vm354, %v360, 2147483647
        %v362 = vand.u32 %v361, 65535
        %v363 = vshra.s32 %v361, 16
        %v364 = vcvt.s32.f32 %v362
        %v365 = vcvt.s32.f32 %v363
        %366 = vmin.xlane.f32.xlu0 %v365
        %v367 = vpop.xlane.xlu0 %366
        %vm368 = vcmp.eq.f32.partialorder %v365, %v367
        %v369 = vsel %vm368, %v364, inf
        %370 = vmin.xlane.f32.xlu0 %v369
        %v371 = vpop.xlane.xlu0 %370
        %v372 = vcvt.f32.s32 %v371
        %v373 = vcvt.f32.s32 %v367
        %v374 = vshll.u32 %v373, 16
        %v375 = vadd.s32 %v374, %v372
        %vm376 = vcmp.eq.s32.totalorder %v288, %v375
        %v377 = vsel %vm376, -inf, %v353
        %v378 = vsel %vm354, %v377, -inf
        %379 = vmax.xlane.f32.xlu0 %v378
        %v380 = vpop.xlane.xlu0 %379
        %v381 = vadd.f32 %v358, %v380
        %vm382 = vcmp.eq.f32.partialorder %v377, %v380
        %v383 = vsel %vm382, %v288, 16
        %v384 = vsel %vm354, %v383, 2147483647
        %v385 = vand.u32 %v384, 65535
        %v386 = vshra.s32 %v384, 16
        %v387 = vcvt.s32.f32 %v385
        %v388 = vcvt.s32.f32 %v386
        %389 = vmin.xlane.f32.xlu0 %v388
        %v390 = vpop.xlane.xlu0 %389
        %vm391 = vcmp.eq.f32.partialorder %v388, %v390
        %v392 = vsel %vm391, %v387, inf
        %393 = vmin.xlane.f32.xlu0 %v392
        %v394 = vpop.xlane.xlu0 %393
        %v395 = vcvt.f32.s32 %v394
        %v396 = vcvt.f32.s32 %v390
        %v397 = vshll.u32 %v396, 16
        %v398 = vadd.s32 %v397, %v395
        %vm399 = vcmp.eq.s32.totalorder %v288, %v398
        %v400 = vsel %vm399, -inf, %v377
        %v401 = vsel %vm354, %v400, -inf
        %402 = vmax.xlane.f32.xlu0 %v401
        %v403 = vpop.xlane.xlu0 %402
        %v404 = vadd.f32 %v381, %v403
        %vm405 = vcmp.eq.f32.partialorder %v400, %v403
        %v406 = vsel %vm405, %v288, 16
        %v407 = vsel %vm354, %v406, 2147483647
        %v408 = vand.u32 %v407, 65535
        %v409 = vshra.s32 %v407, 16
        %v410 = vcvt.s32.f32 %v408
        %v411 = vcvt.s32.f32 %v409
        %412 = vmin.xlane.f32.xlu0 %v411
        %v413 = vpop.xlane.xlu0 %412
        %vm414 = vcmp.eq.f32.partialorder %v411, %v413
        %v415 = vsel %vm414, %v410, inf
        %416 = vmin.xlane.f32.xlu0 %v415
        %v417 = vpop.xlane.xlu0 %416
        %v418 = vcvt.f32.s32 %v417
        %v419 = vcvt.f32.s32 %v413
        %v420 = vshll.u32 %v419, 16
        %v421 = vadd.s32 %v420, %v418
        %vm422 = vcmp.eq.s32.totalorder %v288, %v421
        %v423 = vsel %vm422, -inf, %v400
        %v424 = vsel %vm354, %v423, -inf
        %425 = vmax.xlane.f32.xlu0 %v424
        %v426 = vpop.xlane.xlu0 %425
        %v427 = vadd.f32 %v404, %v426
        %vm428 = vcmp.eq.f32.partialorder %v423, %v426
        %v429 = vsel %vm428, %v288, 16
        %v430 = vsel %vm354, %v429, 2147483647
        %v431 = vand.u32 %v430, 65535
        %v432 = vshra.s32 %v430, 16
        %v433 = vcvt.s32.f32 %v431
        %v434 = vcvt.s32.f32 %v432
        %435 = vmin.xlane.f32.xlu0 %v434
        %v436 = vpop.xlane.xlu0 %435
        %vm437 = vcmp.eq.f32.partialorder %v434, %v436
        %v438 = vsel %vm437, %v433, inf
        %439 = vmin.xlane.f32.xlu0 %v438
        %v440 = vpop.xlane.xlu0 %439
        %v441 = vcvt.f32.s32 %v440
        %v442 = vcvt.f32.s32 %v436
        %v443 = vshll.u32 %v442, 16
        %v444 = vadd.s32 %v443, %v441
        %vm445 = vcmp.eq.s32.totalorder %v288, %v444
        %v446 = vsel %vm445, -inf, %v423
        %v447 = vsel %vm354, %v446, -inf
        %448 = vmax.xlane.f32.xlu0 %v447
        %v449 = vpop.xlane.xlu0 %448
        %v450 = vadd.f32 %v427, %v449
        %vm451 = vcmp.eq.f32.partialorder %v446, %v449
        %v452 = vsel %vm451, %v288, 16
        %v453 = vsel %vm354, %v452, 2147483647
        %v454 = vand.u32 %v453, 65535
        %v455 = vshra.s32 %v453, 16
        %v456 = vcvt.s32.f32 %v454
        %v457 = vcvt.s32.f32 %v455
        %458 = vmin.xlane.f32.xlu0 %v457
        %v459 = vpop.xlane.xlu0 %458
        %vm460 = vcmp.eq.f32.partialorder %v457, %v459
        %v461 = vsel %vm460, %v456, inf
        %462 = vmin.xlane.f32.xlu0 %v461
        %v463 = vpop.xlane.xlu0 %462
        %v464 = vcvt.f32.s32 %v463
        %v465 = vcvt.f32.s32 %v459
        %v466 = vshll.u32 %v465, 16
        %v467 = vadd.s32 %v466, %v464
        %vm468 = vcmp.eq.s32.totalorder %v288, %v467
        %v469 = vsel %vm468, -inf, %v446
        %v470 = vsel %vm354, %v469, -inf
        %471 = vmax.xlane.f32.xlu0 %v470
        %v472 = vpop.xlane.xlu0 %471
        %v473 = vadd.f32 %v450, %v472
        %vm474 = vcmp.eq.f32.partialorder %v469, %v472
        %v475 = vsel %vm474, %v288, 16
        %v476 = vsel %vm354, %v475, 2147483647
        %v477 = vand.u32 %v476, 65535
        %v478 = vshra.s32 %v476, 16
        %v479 = vcvt.s32.f32 %v477
        %v480 = vcvt.s32.f32 %v478
        %481 = vmin.xlane.f32.xlu0 %v480
        %v482 = vpop.xlane.xlu0 %481
        %vm483 = vcmp.eq.f32.partialorder %v480, %v482
        %v484 = vsel %vm483, %v479, inf
        %485 = vmin.xlane.f32.xlu0 %v484
        %v486 = vpop.xlane.xlu0 %485
        %v487 = vcvt.f32.s32 %v486
        %v488 = vcvt.f32.s32 %v482
        %v489 = vshll.u32 %v488, 16
        %v490 = vadd.s32 %v489, %v487
        %vm491 = vcmp.eq.s32.totalorder %v288, %v490
        %v492 = vsel %vm491, -inf, %v469
        %v493 = vsel %vm354, %v492, -inf
        %494 = vmax.xlane.f32.xlu0 %v493
        %v495 = vpop.xlane.xlu0 %494
        %v496 = vadd.f32 %v473, %v495
        %v497 = vadd.f32 %v496, 0.0
        %s499 = vtos %v497
        %v500 = vstv %s499
        %502 = vst [vmem:[%s239] sm:$0xff] %v500
        %s503 = sand.u32 %s109, 1
        %s504 = scalar_lea.sflag [#allocation4], %s503
        %s505 = sand.u32 %s109, 1
        %s506 = smul.addr %s505, 8
        %s507 = scalar_lea.vmem [#allocation7], %s506
        // Predicated region
        $region41: #{tpu_custom_call.1} parent=31 // pred_check
          %p508 = pneg %p119
        $region42: #{tpu_custom_call.1} parent=31 // pred_check_branch
          %510 = sbr.rel (%p508) target = $region44
        $region43: #{tpu_custom_call.1} parent=31 // pred_region
          %s512 = ssub.s32 128, 128
          %513 = vsyncadd %s504, %s512
          %s514 = smul.addr %s23, 128
          %s515 = scalar_lea.hbm %s3, %s514
          %s517 = sshll.u32 %s507, 4
          %s518 = int_to_ptr.vmem [resolvable:$true] %s517
          %520 = dma.vmem_to_hbm [thread:$0]  %s518, 128, %s515, %s504
        $region44: #{tpu_custom_call.1} parent=31 // pred_fallthru
          _
      $region32: #{tpu_custom_call.1} parent=5 // pred_fallthru
        _
      %p521 = scmp.le.s32.totalorder 2, %s18
      // Predicated region
      $region45: #{tpu_custom_call.1} parent=5 // pred_check
        %p522 = pneg %p521
      $region46: #{tpu_custom_call.1} parent=5 // pred_check_branch
        %524 = sbr.rel (%p522) target = $region48
      $region47: #{tpu_custom_call.1} parent=5 // pred_region
        %s525 = ssub.s32 %s18, 2
        // Predicated region
        $region49: #{tpu_custom_call.1} parent=47 // pred_check
          %p526 = pneg %p125
        $region50: #{tpu_custom_call.1} parent=47 // pred_check_branch
          %528 = sbr.rel (%p526) target = $region52
        $region51: #{tpu_custom_call.1} parent=47 // pred_region
          %s529 = sand.u32 %s110, 1
          %s530 = scalar_lea.sflag [#allocation4], %s529
          %s531 = sand.u32 %s110, 1
          %s532 = smul.addr %s531, 8
          %s533 = scalar_lea.vmem [#allocation7], %s532
          %534 = dma.done %s530, 128
        $region52: #{tpu_custom_call.1} parent=47 // pred_fallthru
          _
      $region48: #{tpu_custom_call.1} parent=5 // pred_fallthru
        _
    $region6: #{tpu_custom_call.1} parent=1 // loop_footer
      %s22 = sadd.s32 1, %s18
    $region7: #{tpu_custom_call.1} parent=1 // loop_footer_branch
      %17 = sbr.rel target = $region3
    $region8: #{tpu_custom_call.1} parent=1 // loop_exit
      _
    %535 = vsyncpa [#allocation3], 1
    %s536 = scalar_lea.sflag [#allocation3], 1
    %537 = vsyncpa %s536, 1
    %538 = vsyncpa [#allocation6], 1
    %s539 = scalar_lea.sflag [#allocation6], 1
    %540 = vsyncpa %s539, 1
    %541 = vsyncpa [#allocation4], 1
    %s542 = scalar_lea.sflag [#allocation4], 1
    %543 = vsyncpa %s542, 1

</llo_original>
